<compile_context>
chip_gen: v7x
topology: tpu7x:2x2x1
jax: 0.10.0
libtpu: 0.0.40
codegen_flags: <defaults>
</compile_context>

<pallas_src>
import functools

import jax
import jax.numpy as jnp
import numpy as np
from jax import lax
from jax.experimental import pallas as pl
from jax.experimental.pallas import tpu as pltpu


# --------------------------------------------------------------------------------------
# Per-level fused focal + huber loss kernel (NCHW layout, emits packed partial sums)
# --------------------------------------------------------------------------------------
def _level_loss_kernel(x_ref, tgt_ref, bo_ref, bt_ref, out_ref, *,
                       num_classes, alpha, gamma, delta, int_gamma):
    C = num_classes
    A = tgt_ref.shape[1]
    T = x_ref.shape[2]

    one_m_alpha = 1.0 - alpha
    alpha_delta = 2.0 * alpha - 1.0

    # Class index along the sublane (channel) axis of ONE anchor slab.  Hoisted out of
    # the anchor loop; no runtime integer div/mod anywhere.
    c_idx = lax.broadcasted_iota(jnp.int32, (C, T), 0)

    cls_sum = jnp.zeros((), jnp.float32)
    for a in range(A):                                        # A is small & static
        xs = x_ref[0, a * C:(a + 1) * C, :].astype(jnp.float32)   # [C, T] logits slab
        ta = tgt_ref[0, a:a + 1, :]                               # [1, T] class id
        onehot = jnp.logical_and(ta >= 0, ta == c_idx).astype(jnp.float32)  # [C, T]
        valid = (ta != -2).astype(jnp.float32)                    # [1, T], -2 = ignore

        # shared softplus pieces:  s = log1p(exp(-|x|)),  bce = relu(x) - x*t + s
        relu_x = jnp.maximum(xs, 0.0)
        e = jnp.exp(-jnp.abs(xs))
        s = jnp.log1p(e)
        bce = relu_x - xs * onehot + s

        if int_gamma is not None:
            # modulator = (1 - p_t)^gamma via sigmoid identity; square instead of exp.
            one_plus_e = 1.0 + e
            r = pl.reciprocal(one_plus_e, approx=True)
            r = r * (2.0 - one_plus_e * r)          # one Newton step -> f32-accurate
            p = jnp.where(xs >= 0.0, r, 1.0 - r)    # sigmoid(x)
            one_m_pt = jnp.where(onehot > 0.0, 1.0 - p, p)
            mod = one_m_pt
            for _ in range(int_gamma - 1):
                mod = mod * one_m_pt
        else:
            # general gamma fallback: single extra exp (softplus(-x) = relu(-x) + s)
            relu_nx = relu_x - xs
            mod = jnp.exp(-gamma * (onehot * xs + relu_nx + s))

        # alpha weighting + ignore mask fused into one affine weight
        w = (one_m_alpha + alpha_delta * onehot) * valid
        cls_sum = cls_sum + jnp.sum(w * mod * bce)

    # huber / box regression (lane axis = H*W, so this path is lane-dense for free)
    bo = bo_ref[0].astype(jnp.float32)               # [4A, T]
    bt = bt_ref[0].astype(jnp.float32)               # [4A, T]
    abs_err = jnp.abs(bt - bo)                       # huber(input=targets, target=outputs)
    quad = jnp.minimum(abs_err, delta)
    lin = abs_err - quad
    hub = 0.5 * quad * quad + delta * lin
    box_sum = jnp.sum(hub * (bt != 0.0).astype(jnp.float32))

    # Pack both partial sums into one lane-dense 128-wide row (single unmasked store).
    lane = lax.broadcasted_iota(jnp.int32, (1, 128), 1)
    out_ref[0, 0] = jnp.where(lane == 0, cls_sum,
                              jnp.where(lane == 1, box_sum, 0.0))


# --------------------------------------------------------------------------------------
# Tiling / VMEM heuristics
# --------------------------------------------------------------------------------------
def _default_vmem_limit():
    # ~half of physical VMEM, capped at 64 MiB: 64 MiB on v5e/v6e (128 MiB physical),
    # 32 MiB on v7x (64 MiB physical).  Conservative fallback if the query is missing.
    try:
        cap = int(pltpu.get_tpu_info().vmem_capacity_bytes)
        return max(16 * 1024 * 1024, min(64 * 1024 * 1024, cap // 2))
    except Exception:
        return 32 * 1024 * 1024


def _lane_tile(hw, rows, vmem_limit_bytes, max_lane_tile=None):
    """Pick the lane (H*W) tile: multiple of 128 dividing hw, sized from a VMEM budget."""
    budget = max(128 * 128 * 4, vmem_limit_bytes // 12)   # one logits block << scoped VMEM
    cap = max(128, (budget // (rows * 4)) // 128 * 128)
    if max_lane_tile is not None:
        cap = max(128, min(cap, (max_lane_tile // 128) * 128))
    if hw <= cap:
        return hw                                          # full spatial extent (allowed)
    t = cap
    while t >= 128:
        if hw % t == 0:
            return t
        t -= 128
    return hw                                              # fallback: single block


# --------------------------------------------------------------------------------------
# Per-level wrapper: one pallas_call over the native NCHW layout
# --------------------------------------------------------------------------------------
def _level_partial_sums(cls_out_nchw, box_out_nchw, cls_tgt_nhwa, box_tgt_nhwa, *,
                        num_classes, alpha, gamma, delta, vmem_limit_bytes,
                        max_lane_tile=None):
    B, AC, H, W = cls_out_nchw.shape
    A = cls_tgt_nhwa.shape[-1]
    assert AC == A * num_classes
    assert box_out_nchw.shape[1] == A * 4
    HW = H * W

    # Free reshapes of the dominant streams (NCHW is contiguous over H*W).
    x = cls_out_nchw.reshape(B, AC, HW)
    bo = box_out_nchw.reshape(B, A * 4, HW)
    # Only the (small) targets are transposed to line up with the NCHW channel axis.
    tgt = jnp.transpose(cls_tgt_nhwa.astype(jnp.int32), (0, 3, 1, 2)).reshape(B, A, HW)
    bt = jnp.transpose(box_tgt_nhwa, (0, 3, 1, 2)).reshape(B, A * 4, HW)

    T = _lane_tile(HW, AC, vmem_limit_bytes, max_lane_tile)
    n_hw = HW // T

    g = float(gamma)
    int_gamma = int(g) if (g.is_integer() and 1 <= int(g) <= 4) else None
    kernel = functools.partial(_level_loss_kernel, num_classes=num_classes,
                               alpha=float(alpha), gamma=g, delta=float(delta),
                               int_gamma=int_gamma)

    out = pl.pallas_call(
        kernel,
        out_shape=jax.ShapeDtypeStruct((B, n_hw, 1, 128), jnp.float32),
        grid_spec=pltpu.PrefetchScalarGridSpec(
            num_scalar_prefetch=0,
            grid=(B, n_hw),
            in_specs=[pl.BlockSpec((1, AC, T), lambda b, h: (b, 0, h)),
                      pl.BlockSpec((1, A, T), lambda b, h: (b, 0, h)),
                      pl.BlockSpec((1, A * 4, T), lambda b, h: (b, 0, h)),
                      pl.BlockSpec((1, A * 4, T), lambda b, h: (b, 0, h))],
            out_specs=pl.BlockSpec((1, 1, 1, 128), lambda b, h: (b, h, 0, 0)),
        ),
        compiler_params=pltpu.CompilerParams(
            dimension_semantics=("parallel", "parallel"),
            vmem_limit_bytes=vmem_limit_bytes),
    )(x, tgt, bo, bt)

    cls_per_image = jnp.sum(out[..., 0], axis=(1, 2))       # (B,)
    box_per_image = jnp.sum(out[..., 1], axis=(1, 2))       # (B,)
    return cls_per_image, box_per_image


# --------------------------------------------------------------------------------------
# Full forward pass
# --------------------------------------------------------------------------------------
def detection_classification_loss(cls_outputs, box_outputs, classification_outputs,
                                  cls_targets, box_targets, classification_targets,
                                  num_positives, *, num_classes, alpha, gamma, delta,
                                  box_loss_weight, classification_loss_weight,
                                  cls_loss_weight, has_box=None,
                                  vmem_limit_bytes=None, max_lane_tile=None):
    if vmem_limit_bytes is None:
        vmem_limit_bytes = _default_vmem_limit()

    B = cls_outputs[0].shape[0]
    cls_pi = jnp.zeros((B,), jnp.float32)
    box_pi = jnp.zeros((B,), jnp.float32)
    for lvl in range(len(cls_outputs)):
        c_b, b_b = _level_partial_sums(
            cls_outputs[lvl], box_outputs[lvl], cls_targets[lvl], box_targets[lvl],
            num_classes=num_classes, alpha=alpha, gamma=gamma, delta=delta,
            vmem_limit_bytes=vmem_limit_bytes, max_lane_tile=max_lane_tile)
        cls_pi = cls_pi + c_b
        box_pi = box_pi + b_b

    if has_box is not None:
        hb = jnp.reshape(has_box, (-1,)).astype(jnp.float32)   # per-image scale, exact
        cls_pi = cls_pi * hb
        box_pi = box_pi * hb

    npos = jnp.sum(jnp.asarray(num_positives)).astype(jnp.float32) + 1.0
    cls_loss = jnp.sum(cls_pi) / npos
    box_loss = jnp.sum(box_pi) / (npos * 4.0)

    # Image-level CrossEntropy head: (B, K) is smaller than one vreg -> plain JAX.
    # TODO(synk): on v5e, feed bf16 cls/box outputs to halve the dominant HBM stream
    #             (kernel already upcasts to f32 after load).
    logits = classification_outputs.astype(jnp.float32)
    tgt_i = classification_targets.astype(jnp.int32)
    lse = jax.scipy.special.logsumexp(logits, axis=-1)
    picked = jnp.take_along_axis(logits, tgt_i[:, None], axis=-1)[:, 0]
    ce_loss = jnp.mean(lse - picked)

    total_loss = (cls_loss_weight * cls_loss
                  + box_loss_weight * box_loss
                  + classification_loss_weight * ce_loss)
    return total_loss, cls_loss, box_loss, ce_loss


# --------------------------------------------------------------------------------------
# Pure-JAX reference (mirrors the PyTorch code) for the correctness check
# --------------------------------------------------------------------------------------
def _reference(cls_outputs, box_outputs, classification_outputs,
               cls_targets, box_targets, classification_targets, num_positives,
               *, num_classes, alpha, gamma, delta,
               box_loss_weight, classification_loss_weight, cls_loss_weight):
    npos_sum = jnp.sum(num_positives) + 1.0
    cls_losses, box_losses = [], []
    for lvl in range(len(cls_outputs)):
        ct = cls_targets[lvl]
        non_neg = ct >= 0
        oh = jax.nn.one_hot(ct * non_neg, num_classes)
        oh = jnp.where(non_neg[..., None], oh, 0.0)
        B, H, W, A, C = oh.shape
        tgt = oh.reshape(B, H, W, A * C)
        x = jnp.transpose(cls_outputs[lvl], (0, 2, 3, 1))
        bce = jnp.maximum(x, 0.0) - x * tgt + jnp.log1p(jnp.exp(-jnp.abs(x)))
        mod = jnp.exp(gamma * tgt * (-x) - gamma * jnp.log1p(jnp.exp(-x)))
        loss = mod * bce
        wl = jnp.where(tgt == 1.0, alpha * loss, (1.0 - alpha) * loss) / npos_sum
        wl = wl.reshape(B, H, W, A, C) * (ct != -2)[..., None].astype(jnp.float32)
        cls_losses.append(jnp.sum(wl))

        bo = jnp.transpose(box_outputs[lvl], (0, 2, 3, 1))
        bt = box_targets[lvl]
        abs_err = jnp.abs(bt - bo)
        quad = jnp.minimum(abs_err, delta)
        lin = abs_err - quad
        hl = (0.5 * quad ** 2 + delta * lin) * (bt != 0.0).astype(jnp.float32)
        box_losses.append(jnp.sum(hl) / (npos_sum * 4.0))
    cls_loss = jnp.sum(jnp.stack(cls_losses))
    box_loss = jnp.sum(jnp.stack(box_losses))
    lse = jax.scipy.special.logsumexp(classification_outputs, axis=-1)
    picked = jnp.take_along_axis(classification_outputs,
                                 classification_targets[:, None].astype(jnp.int32),
                                 axis=-1)[:, 0]
    ce = jnp.mean(lse - picked)
    total = cls_loss_weight * cls_loss + box_loss_weight * box_loss + classification_loss_weight * ce
    return total, cls_loss, box_loss, ce


# --------------------------------------------------------------------------------------
if __name__ == "__main__":
    num_classes = 4          # object classes per anchor
    num_anchors = 3
    alpha, gamma, delta = 0.25, 2.0, 0.1
    box_loss_weight = 50.0
    classification_loss_weight = 1.0
    cls_loss_weight = 1.0
    num_image_classes = 8    # image-level classification head size

    B = 2
    level_hw = [(16, 16), (4, 4)]   # two FPN levels (one tiled over lanes, one full)

    key = jax.random.PRNGKey(0)
    cls_outputs, box_outputs, cls_targets, box_targets = [], [], [], []
    for (H, W) in level_hw:
        key, k1, k2, k3, k4, k5 = jax.random.split(key, 6)
        cls_outputs.append(jax.random.normal(k1, (B, num_anchors * num_classes, H, W), jnp.float32))
        box_outputs.append(jax.random.normal(k2, (B, num_anchors * 4, H, W), jnp.float32))
        # class targets in {-2, -1, 0..num_classes-1}
        cls_targets.append(jax.random.randint(k3, (B, H, W, num_anchors), -2, num_classes, jnp.int32))
        # box targets with some exact zeros (mask exercise)
        bt = jax.random.normal(k4, (B, H, W, num_anchors * 4), jnp.float32)
        zero_mask = jax.random.bernoulli(k5, 0.5, bt.shape)
        box_targets.append(jnp.where(zero_mask, bt, 0.0))

    key, k6, k7 = jax.random.split(key, 3)
    classification_outputs = jax.random.normal(k6, (B, num_image_classes), jnp.float32)
    classification_targets = jax.random.randint(k7, (B,), 0, num_image_classes, jnp.int32)
    num_positives = jnp.array([3.0, 5.0], jnp.float32)

    kwargs = dict(num_classes=num_classes, alpha=alpha, gamma=gamma, delta=delta,
                  box_loss_weight=box_loss_weight,
                  classification_loss_weight=classification_loss_weight,
                  cls_loss_weight=cls_loss_weight)

    # max_lane_tile=128 so the 16x16 level exercises multiple hw blocks per batch image.
    out = detection_classification_loss(cls_outputs, box_outputs, classification_outputs,
                                        cls_targets, box_targets, classification_targets,
                                        num_positives, max_lane_tile=128, **kwargs)
    out = jax.block_until_ready(out)

    ref = _reference(cls_outputs, box_outputs, classification_outputs,
                     cls_targets, box_targets, classification_targets,
                     num_positives, **kwargs)

    for o, r in zip(out, ref):
        np.testing.assert_allclose(np.asarray(o), np.asarray(r), rtol=1e-5, atol=1e-5)

    print("KERNEL_OK")
</pallas_src>

<mosaic_0001>
module attributes {stable_mosaic.version = 11 : i64} {
  func.func @_level_loss_kernel(%arg0: i32, %arg1: i32, %arg2: memref<1x12x128xf32, #tpu.memory_space<vmem>>, %arg3: memref<1x3x128xi32, #tpu.memory_space<vmem>>, %arg4: memref<1x12x128xf32, #tpu.memory_space<vmem>>, %arg5: memref<1x12x128xf32, #tpu.memory_space<vmem>>, %arg6: memref<1x1x1x128xf32, #tpu.memory_space<vmem>>) attributes {dimension_semantics = [#tpu.dimension_semantics<parallel>, #tpu.dimension_semantics<parallel>], iteration_bounds = array<i64: 2, 2>, scalar_prefetch = 0 : i64, scratch_operands = 0 : i64, tpu.core_type = #tpu.core_type<tc>, window_params = [{transform_indices = @transform_0, window_bounds = array<i64: 1, 12, 128>}, {transform_indices = @transform_1, window_bounds = array<i64: 1, 3, 128>}, {transform_indices = @transform_2, window_bounds = array<i64: 1, 12, 128>}, {transform_indices = @transform_3, window_bounds = array<i64: 1, 12, 128>}, {transform_indices = @transform_4, window_bounds = array<i64: 1, 1, 1, 128>}]} {
    %0 = tpu.iota {dimensions = array<i32: 0>} : vector<4x128xi32>
    %c0 = arith.constant 0 : index
    %c0_0 = arith.constant 0 : index
    %c0_1 = arith.constant 0 : index
    %1 = vector.load %arg2[%c0, %c0_0, %c0_1] : memref<1x12x128xf32, #tpu.memory_space<vmem>>, vector<1x4x128xf32>
    %2 = vector.shape_cast %1 : vector<1x4x128xf32> to vector<4x128xf32>
    %c0_2 = arith.constant 0 : index
    %c0_3 = arith.constant 0 : index
    %c0_4 = arith.constant 0 : index
    %3 = vector.load %arg3[%c0_2, %c0_3, %c0_4] : memref<1x3x128xi32, #tpu.memory_space<vmem>>, vector<1x1x128xi32>
    %4 = vector.shape_cast %3 : vector<1x1x128xi32> to vector<1x128xi32>
    %c0_i32 = arith.constant 0 : i32
    %5 = vector.broadcast %c0_i32 : i32 to vector<1x128xi32>
    %6 = arith.cmpi sge, %4, %5 : vector<1x128xi32>
    %7 = vector.broadcast %4 : vector<1x128xi32> to vector<4x128xi32>
    %8 = arith.cmpi eq, %7, %0 : vector<4x128xi32>
    %9 = vector.broadcast %6 : vector<1x128xi1> to vector<4x128xi1>
    %10 = arith.andi %9, %8 : vector<4x128xi1>
    %11 = arith.extui %10 : vector<4x128xi1> to vector<4x128xi32>
    %12 = arith.sitofp %11 : vector<4x128xi32> to vector<4x128xf32>
    %c-2_i32 = arith.constant -2 : i32
    %13 = vector.broadcast %c-2_i32 : i32 to vector<1x128xi32>
    %14 = arith.cmpi ne, %4, %13 : vector<1x128xi32>
    %15 = arith.extui %14 : vector<1x128xi1> to vector<1x128xi32>
    %16 = arith.sitofp %15 : vector<1x128xi32> to vector<1x128xf32>
    %cst = arith.constant 0.000000e+00 : f32
    %17 = vector.broadcast %cst : f32 to vector<4x128xf32>
    %18 = arith.maximumf %2, %17 : vector<4x128xf32>
    %19 = math.absf %2 : vector<4x128xf32>
    %cst_5 = arith.constant 0.000000e+00 : f32
    %20 = vector.broadcast %cst_5 : f32 to vector<4x128xf32>
    %21 = arith.subf %20, %19 : vector<4x128xf32>
    %22 = math.exp %21 : vector<4x128xf32>
    %23 = math.log1p %22 : vector<4x128xf32>
    %24 = arith.mulf %2, %12 : vector<4x128xf32>
    %25 = arith.subf %18, %24 : vector<4x128xf32>
    %26 = arith.addf %25, %23 : vector<4x128xf32>
    %cst_6 = arith.constant 1.000000e+00 : f32
    %27 = vector.broadcast %cst_6 : f32 to vector<4x128xf32>
    %28 = arith.addf %27, %22 : vector<4x128xf32>
    %29 = tpu.reciprocal %28 {approx = true} : vector<4x128xf32> -> vector<4x128xf32>
    %30 = arith.mulf %28, %29 : vector<4x128xf32>
    %cst_7 = arith.constant 2.000000e+00 : f32
    %31 = vector.broadcast %cst_7 : f32 to vector<4x128xf32>
    %32 = arith.subf %31, %30 : vector<4x128xf32>
    %33 = arith.mulf %29, %32 : vector<4x128xf32>
    %cst_8 = arith.constant 0.000000e+00 : f32
    %34 = vector.broadcast %cst_8 : f32 to vector<4x128xf32>
    %35 = arith.cmpf oge, %2, %34 : vector<4x128xf32>
    %cst_9 = arith.constant 1.000000e+00 : f32
    %36 = vector.broadcast %cst_9 : f32 to vector<4x128xf32>
    %37 = arith.subf %36, %33 : vector<4x128xf32>
    %38 = arith.select %35, %33, %37 : vector<4x128xi1>, vector<4x128xf32>
    %cst_10 = arith.constant 0.000000e+00 : f32
    %39 = vector.broadcast %cst_10 : f32 to vector<4x128xf32>
    %40 = arith.cmpf ogt, %12, %39 : vector<4x128xf32>
    %cst_11 = arith.constant 1.000000e+00 : f32
    %41 = vector.broadcast %cst_11 : f32 to vector<4x128xf32>
    %42 = arith.subf %41, %38 : vector<4x128xf32>
    %43 = arith.select %40, %42, %38 : vector<4x128xi1>, vector<4x128xf32>
    %44 = arith.mulf %43, %43 : vector<4x128xf32>
    %cst_12 = arith.constant -5.000000e-01 : f32
    %45 = vector.broadcast %cst_12 : f32 to vector<4x128xf32>
    %46 = arith.mulf %45, %12 : vector<4x128xf32>
    %cst_13 = arith.constant 7.500000e-01 : f32
    %47 = vector.broadcast %cst_13 : f32 to vector<4x128xf32>
    %48 = arith.addf %47, %46 : vector<4x128xf32>
    %49 = vector.broadcast %16 : vector<1x128xf32> to vector<4x128xf32>
    %50 = arith.mulf %48, %49 : vector<4x128xf32>
    %51 = arith.mulf %50, %44 : vector<4x128xf32>
    %52 = arith.mulf %51, %26 : vector<4x128xf32>
    %53 = vector.shape_cast %52 : vector<4x128xf32> to vector<1x4x128xf32>
    %cst_14 = arith.constant dense<0.000000e+00> : vector<1xf32>
    %54 = vector.multi_reduction <add>, %53, %cst_14 [1, 2] : vector<1x4x128xf32> to vector<1xf32>
    %55 = vector.shape_cast %54 : vector<1xf32> to vector<1x1x1xf32>
    %56 = vector.extract %55[0, 0, 0] : f32 from vector<1x1x1xf32>
    %cst_15 = arith.constant 0.000000e+00 : f32
    %57 = arith.addf %cst_15, %56 : f32
    %c0_16 = arith.constant 0 : index
    %c4 = arith.constant 4 : index
    %c0_17 = arith.constant 0 : index
    %58 = vector.load %arg2[%c0_16, %c4, %c0_17] : memref<1x12x128xf32, #tpu.memory_space<vmem>>, vector<1x4x128xf32>
    %59 = vector.shape_cast %58 : vector<1x4x128xf32> to vector<4x128xf32>
    %c0_18 = arith.constant 0 : index
    %c1 = arith.constant 1 : index
    %c0_19 = arith.constant 0 : index
    %60 = vector.load %arg3[%c0_18, %c1, %c0_19] : memref<1x3x128xi32, #tpu.memory_space<vmem>>, vector<1x1x128xi32>
    %61 = vector.shape_cast %60 : vector<1x1x128xi32> to vector<1x128xi32>
    %c0_i32_20 = arith.constant 0 : i32
    %62 = vector.broadcast %c0_i32_20 : i32 to vector<1x128xi32>
    %63 = arith.cmpi sge, %61, %62 : vector<1x128xi32>
    %64 = vector.broadcast %61 : vector<1x128xi32> to vector<4x128xi32>
    %65 = arith.cmpi eq, %64, %0 : vector<4x128xi32>
    %66 = vector.broadcast %63 : vector<1x128xi1> to vector<4x128xi1>
    %67 = arith.andi %66, %65 : vector<4x128xi1>
    %68 = arith.extui %67 : vector<4x128xi1> to vector<4x128xi32>
    %69 = arith.sitofp %68 : vector<4x128xi32> to vector<4x128xf32>
    %c-2_i32_21 = arith.constant -2 : i32
    %70 = vector.broadcast %c-2_i32_21 : i32 to vector<1x128xi32>
    %71 = arith.cmpi ne, %61, %70 : vector<1x128xi32>
    %72 = arith.extui %71 : vector<1x128xi1> to vector<1x128xi32>
    %73 = arith.sitofp %72 : vector<1x128xi32> to vector<1x128xf32>
    %cst_22 = arith.constant 0.000000e+00 : f32
    %74 = vector.broadcast %cst_22 : f32 to vector<4x128xf32>
    %75 = arith.maximumf %59, %74 : vector<4x128xf32>
    %76 = math.absf %59 : vector<4x128xf32>
    %cst_23 = arith.constant 0.000000e+00 : f32
    %77 = vector.broadcast %cst_23 : f32 to vector<4x128xf32>
    %78 = arith.subf %77, %76 : vector<4x128xf32>
    %79 = math.exp %78 : vector<4x128xf32>
    %80 = math.log1p %79 : vector<4x128xf32>
    %81 = arith.mulf %59, %69 : vector<4x128xf32>
    %82 = arith.subf %75, %81 : vector<4x128xf32>
    %83 = arith.addf %82, %80 : vector<4x128xf32>
    %cst_24 = arith.constant 1.000000e+00 : f32
    %84 = vector.broadcast %cst_24 : f32 to vector<4x128xf32>
    %85 = arith.addf %84, %79 : vector<4x128xf32>
    %86 = tpu.reciprocal %85 {approx = true} : vector<4x128xf32> -> vector<4x128xf32>
    %87 = arith.mulf %85, %86 : vector<4x128xf32>
    %cst_25 = arith.constant 2.000000e+00 : f32
    %88 = vector.broadcast %cst_25 : f32 to vector<4x128xf32>
    %89 = arith.subf %88, %87 : vector<4x128xf32>
    %90 = arith.mulf %86, %89 : vector<4x128xf32>
    %cst_26 = arith.constant 0.000000e+00 : f32
    %91 = vector.broadcast %cst_26 : f32 to vector<4x128xf32>
    %92 = arith.cmpf oge, %59, %91 : vector<4x128xf32>
    %cst_27 = arith.constant 1.000000e+00 : f32
    %93 = vector.broadcast %cst_27 : f32 to vector<4x128xf32>
    %94 = arith.subf %93, %90 : vector<4x128xf32>
    %95 = arith.select %92, %90, %94 : vector<4x128xi1>, vector<4x128xf32>
    %cst_28 = arith.constant 0.000000e+00 : f32
    %96 = vector.broadcast %cst_28 : f32 to vector<4x128xf32>
    %97 = arith.cmpf ogt, %69, %96 : vector<4x128xf32>
    %cst_29 = arith.constant 1.000000e+00 : f32
    %98 = vector.broadcast %cst_29 : f32 to vector<4x128xf32>
    %99 = arith.subf %98, %95 : vector<4x128xf32>
    %100 = arith.select %97, %99, %95 : vector<4x128xi1>, vector<4x128xf32>
    %101 = arith.mulf %100, %100 : vector<4x128xf32>
    %cst_30 = arith.constant -5.000000e-01 : f32
    %102 = vector.broadcast %cst_30 : f32 to vector<4x128xf32>
    %103 = arith.mulf %102, %69 : vector<4x128xf32>
    %cst_31 = arith.constant 7.500000e-01 : f32
    %104 = vector.broadcast %cst_31 : f32 to vector<4x128xf32>
    %105 = arith.addf %104, %103 : vector<4x128xf32>
    %106 = vector.broadcast %73 : vector<1x128xf32> to vector<4x128xf32>
    %107 = arith.mulf %105, %106 : vector<4x128xf32>
    %108 = arith.mulf %107, %101 : vector<4x128xf32>
    %109 = arith.mulf %108, %83 : vector<4x128xf32>
    %110 = vector.shape_cast %109 : vector<4x128xf32> to vector<1x4x128xf32>
    %cst_32 = arith.constant dense<0.000000e+00> : vector<1xf32>
    %111 = vector.multi_reduction <add>, %110, %cst_32 [1, 2] : vector<1x4x128xf32> to vector<1xf32>
    %112 = vector.shape_cast %111 : vector<1xf32> to vector<1x1x1xf32>
    %113 = vector.extract %112[0, 0, 0] : f32 from vector<1x1x1xf32>
    %114 = arith.addf %57, %113 : f32
    %c0_33 = arith.constant 0 : index
    %c8 = arith.constant 8 : index
    %c0_34 = arith.constant 0 : index
    %115 = vector.load %arg2[%c0_33, %c8, %c0_34] : memref<1x12x128xf32, #tpu.memory_space<vmem>>, vector<1x4x128xf32>
    %116 = vector.shape_cast %115 : vector<1x4x128xf32> to vector<4x128xf32>
    %c0_35 = arith.constant 0 : index
    %c2 = arith.constant 2 : index
    %c0_36 = arith.constant 0 : index
    %117 = vector.load %arg3[%c0_35, %c2, %c0_36] : memref<1x3x128xi32, #tpu.memory_space<vmem>>, vector<1x1x128xi32>
    %118 = vector.shape_cast %117 : vector<1x1x128xi32> to vector<1x128xi32>
    %c0_i32_37 = arith.constant 0 : i32
    %119 = vector.broadcast %c0_i32_37 : i32 to vector<1x128xi32>
    %120 = arith.cmpi sge, %118, %119 : vector<1x128xi32>
    %121 = vector.broadcast %118 : vector<1x128xi32> to vector<4x128xi32>
    %122 = arith.cmpi eq, %121, %0 : vector<4x128xi32>
    %123 = vector.broadcast %120 : vector<1x128xi1> to vector<4x128xi1>
    %124 = arith.andi %123, %122 : vector<4x128xi1>
    %125 = arith.extui %124 : vector<4x128xi1> to vector<4x128xi32>
    %126 = arith.sitofp %125 : vector<4x128xi32> to vector<4x128xf32>
    %c-2_i32_38 = arith.constant -2 : i32
    %127 = vector.broadcast %c-2_i32_38 : i32 to vector<1x128xi32>
    %128 = arith.cmpi ne, %118, %127 : vector<1x128xi32>
    %129 = arith.extui %128 : vector<1x128xi1> to vector<1x128xi32>
    %130 = arith.sitofp %129 : vector<1x128xi32> to vector<1x128xf32>
    %cst_39 = arith.constant 0.000000e+00 : f32
    %131 = vector.broadcast %cst_39 : f32 to vector<4x128xf32>
    %132 = arith.maximumf %116, %131 : vector<4x128xf32>
    %133 = math.absf %116 : vector<4x128xf32>
    %cst_40 = arith.constant 0.000000e+00 : f32
    %134 = vector.broadcast %cst_40 : f32 to vector<4x128xf32>
    %135 = arith.subf %134, %133 : vector<4x128xf32>
    %136 = math.exp %135 : vector<4x128xf32>
    %137 = math.log1p %136 : vector<4x128xf32>
    %138 = arith.mulf %116, %126 : vector<4x128xf32>
    %139 = arith.subf %132, %138 : vector<4x128xf32>
    %140 = arith.addf %139, %137 : vector<4x128xf32>
    %cst_41 = arith.constant 1.000000e+00 : f32
    %141 = vector.broadcast %cst_41 : f32 to vector<4x128xf32>
    %142 = arith.addf %141, %136 : vector<4x128xf32>
    %143 = tpu.reciprocal %142 {approx = true} : vector<4x128xf32> -> vector<4x128xf32>
    %144 = arith.mulf %142, %143 : vector<4x128xf32>
    %cst_42 = arith.constant 2.000000e+00 : f32
    %145 = vector.broadcast %cst_42 : f32 to vector<4x128xf32>
    %146 = arith.subf %145, %144 : vector<4x128xf32>
    %147 = arith.mulf %143, %146 : vector<4x128xf32>
    %cst_43 = arith.constant 0.000000e+00 : f32
    %148 = vector.broadcast %cst_43 : f32 to vector<4x128xf32>
    %149 = arith.cmpf oge, %116, %148 : vector<4x128xf32>
    %cst_44 = arith.constant 1.000000e+00 : f32
    %150 = vector.broadcast %cst_44 : f32 to vector<4x128xf32>
    %151 = arith.subf %150, %147 : vector<4x128xf32>
    %152 = arith.select %149, %147, %151 : vector<4x128xi1>, vector<4x128xf32>
    %cst_45 = arith.constant 0.000000e+00 : f32
    %153 = vector.broadcast %cst_45 : f32 to vector<4x128xf32>
    %154 = arith.cmpf ogt, %126, %153 : vector<4x128xf32>
    %cst_46 = arith.constant 1.000000e+00 : f32
    %155 = vector.broadcast %cst_46 : f32 to vector<4x128xf32>
    %156 = arith.subf %155, %152 : vector<4x128xf32>
    %157 = arith.select %154, %156, %152 : vector<4x128xi1>, vector<4x128xf32>
    %158 = arith.mulf %157, %157 : vector<4x128xf32>
    %cst_47 = arith.constant -5.000000e-01 : f32
    %159 = vector.broadcast %cst_47 : f32 to vector<4x128xf32>
    %160 = arith.mulf %159, %126 : vector<4x128xf32>
    %cst_48 = arith.constant 7.500000e-01 : f32
    %161 = vector.broadcast %cst_48 : f32 to vector<4x128xf32>
    %162 = arith.addf %161, %160 : vector<4x128xf32>
    %163 = vector.broadcast %130 : vector<1x128xf32> to vector<4x128xf32>
    %164 = arith.mulf %162, %163 : vector<4x128xf32>
    %165 = arith.mulf %164, %158 : vector<4x128xf32>
    %166 = arith.mulf %165, %140 : vector<4x128xf32>
    %167 = vector.shape_cast %166 : vector<4x128xf32> to vector<1x4x128xf32>
    %cst_49 = arith.constant dense<0.000000e+00> : vector<1xf32>
    %168 = vector.multi_reduction <add>, %167, %cst_49 [1, 2] : vector<1x4x128xf32> to vector<1xf32>
    %169 = vector.shape_cast %168 : vector<1xf32> to vector<1x1x1xf32>
    %170 = vector.extract %169[0, 0, 0] : f32 from vector<1x1x1xf32>
    %171 = arith.addf %114, %170 : f32
    %c0_50 = arith.constant 0 : index
    %c0_51 = arith.constant 0 : index
    %c0_52 = arith.constant 0 : index
    %172 = vector.load %arg4[%c0_50, %c0_51, %c0_52] : memref<1x12x128xf32, #tpu.memory_space<vmem>>, vector<1x12x128xf32>
    %173 = vector.shape_cast %172 : vector<1x12x128xf32> to vector<12x128xf32>
    %c0_53 = arith.constant 0 : index
    %c0_54 = arith.constant 0 : index
    %c0_55 = arith.constant 0 : index
    %174 = vector.load %arg5[%c0_53, %c0_54, %c0_55] : memref<1x12x128xf32, #tpu.memory_space<vmem>>, vector<1x12x128xf32>
    %175 = vector.shape_cast %174 : vector<1x12x128xf32> to vector<12x128xf32>
    %176 = arith.subf %175, %173 : vector<12x128xf32>
    %177 = math.absf %176 : vector<12x128xf32>
    %cst_56 = arith.constant 1.000000e-01 : f32
    %178 = vector.broadcast %cst_56 : f32 to vector<12x128xf32>
    %179 = arith.minimumf %177, %178 : vector<12x128xf32>
    %180 = arith.subf %177, %179 : vector<12x128xf32>
    %cst_57 = arith.constant 5.000000e-01 : f32
    %181 = vector.broadcast %cst_57 : f32 to vector<12x128xf32>
    %182 = arith.mulf %181, %179 : vector<12x128xf32>
    %183 = arith.mulf %182, %179 : vector<12x128xf32>
    %cst_58 = arith.constant 1.000000e-01 : f32
    %184 = vector.broadcast %cst_58 : f32 to vector<12x128xf32>
    %185 = arith.mulf %184, %180 : vector<12x128xf32>
    %186 = arith.addf %183, %185 : vector<12x128xf32>
    %cst_59 = arith.constant 0.000000e+00 : f32
    %187 = vector.broadcast %cst_59 : f32 to vector<12x128xf32>
    %188 = arith.cmpf one, %175, %187 : vector<12x128xf32>
    %189 = arith.extui %188 : vector<12x128xi1> to vector<12x128xi32>
    %190 = arith.sitofp %189 : vector<12x128xi32> to vector<12x128xf32>
    %191 = arith.mulf %186, %190 : vector<12x128xf32>
    %192 = vector.shape_cast %191 : vector<12x128xf32> to vector<1x12x128xf32>
    %cst_60 = arith.constant dense<0.000000e+00> : vector<1xf32>
    %193 = vector.multi_reduction <add>, %192, %cst_60 [1, 2] : vector<1x12x128xf32> to vector<1xf32>
    %194 = vector.shape_cast %193 : vector<1xf32> to vector<1x1x1xf32>
    %195 = vector.extract %194[0, 0, 0] : f32 from vector<1x1x1xf32>
    %196 = tpu.iota {dimensions = array<i32: 1>} : vector<1x128xi32>
    %c0_i32_61 = arith.constant 0 : i32
    %197 = vector.broadcast %c0_i32_61 : i32 to vector<1x128xi32>
    %198 = arith.cmpi eq, %196, %197 : vector<1x128xi32>
    %c1_i32 = arith.constant 1 : i32
    %199 = vector.broadcast %c1_i32 : i32 to vector<1x128xi32>
    %200 = arith.cmpi eq, %196, %199 : vector<1x128xi32>
    %cst_62 = arith.constant 0.000000e+00 : f32
    %201 = vector.broadcast %195 : f32 to vector<1x128xf32>
    %202 = vector.broadcast %cst_62 : f32 to vector<1x128xf32>
    %203 = arith.select %200, %201, %202 : vector<1x128xi1>, vector<1x128xf32>
    %204 = vector.broadcast %171 : f32 to vector<1x128xf32>
    %205 = arith.select %198, %204, %203 : vector<1x128xi1>, vector<1x128xf32>
    %c0_63 = arith.constant 0 : index
    %c0_64 = arith.constant 0 : index
    %c0_65 = arith.constant 0 : index
    %c0_66 = arith.constant 0 : index
    %206 = vector.load %arg6[%c0_63, %c0_64, %c0_65, %c0_66] : memref<1x1x1x128xf32, #tpu.memory_space<vmem>>, vector<1x1x1x128xf32>
    %207 = vector.shape_cast %206 : vector<1x1x1x128xf32> to vector<1x128xf32>
    %208 = vector.shape_cast %205 : vector<1x128xf32> to vector<1x1x1x128xf32>
    tpu.vector_store %arg6[%c0_63, %c0_64, %c0_65, %c0_66], %208 {strides = array<i32>} : memref<1x1x1x128xf32, #tpu.memory_space<vmem>>, vector<1x1x1x128xf32>,
    return
  }
  func.func @transform_0(%arg0: i32, %arg1: i32) -> (i32, i32, i32) {
    %c0_i32 = arith.constant 0 : i32
    %c0_i32_0 = arith.constant 0 : i32
    return %arg0, %c0_i32, %arg1 : i32, i32, i32
  }
  func.func @transform_1(%arg0: i32, %arg1: i32) -> (i32, i32, i32) {
    %c0_i32 = arith.constant 0 : i32
    %c0_i32_0 = arith.constant 0 : i32
    return %arg0, %c0_i32, %arg1 : i32, i32, i32
  }
  func.func @transform_2(%arg0: i32, %arg1: i32) -> (i32, i32, i32) {
    %c0_i32 = arith.constant 0 : i32
    %c0_i32_0 = arith.constant 0 : i32
    return %arg0, %c0_i32, %arg1 : i32, i32, i32
  }
  func.func @transform_3(%arg0: i32, %arg1: i32) -> (i32, i32, i32) {
    %c0_i32 = arith.constant 0 : i32
    %c0_i32_0 = arith.constant 0 : i32
    return %arg0, %c0_i32, %arg1 : i32, i32, i32
  }
  func.func @transform_4(%arg0: i32, %arg1: i32) -> (i32, i32, i32, i32) {
    %c0_i32 = arith.constant 0 : i32
    %c0_i32_0 = arith.constant 0 : i32
    %c0_i32_1 = arith.constant 0 : i32
    return %arg0, %arg1, %c0_i32, %c0_i32_0 : i32, i32, i32, i32
  }
}

</mosaic_0001>

<llo_original>
// kernel: tpu_custom_call.1
$region0: #{tpu_custom_call.1}
  #allocation0 [shape = 'u32[]', space=smem, size = 0x4, offset = 0x4, fixed_abs, tag = 'smem constant byte address 0x4 - core index']
  #allocation1 [shape = 'u32[144,128]{1,0:T(1,128)}', space=vmem, size = 0x12000, scoped, tag = 'internal scratch']
  %s0 = inlined_call_operand.vmem [shape: f32[2,12,256], index: 0, kind: input, shape index: {}]
  %s1 = inlined_call_operand.vmem [shape: s32[2,3,256], index: 1, kind: input, shape index: {}]
  %s2 = inlined_call_operand.vmem [shape: f32[2,12,256], index: 2, kind: input, shape index: {}]
  %s3 = inlined_call_operand.vmem [shape: f32[2,12,256], index: 3, kind: input, shape index: {}]
  %s4 = inlined_call_operand.hbm [shape: f32[2,2,1,128], index: 4, kind: output, shape index: {}]
  %s5 = sld [smem:[#allocation0]]
  $region163: #{tpu_custom_call.1} parent=0
    _
  %s7 = ssub.s32 1, %s5
  %s8 = scalar_select 0, %s7, %s5
  $region1: #{tpu_custom_call.1} parent=0
    #allocation2 [shape = 'u8[16384]{0}', space=vmem, size = 0x4000, scoped, tag = 'input window, operand 0']
    #allocation3 [shape = 'u8[16384]{0}', space=vmem, size = 0x4000, scoped, tag = 'input window, operand 2']
    #allocation4 [shape = 'u8[16384]{0}', space=vmem, size = 0x4000, scoped, tag = 'input window, operand 3']
    #allocation5 [shape = 'u8[1024]{0}', space=vmem, size = 0x400, scoped, tag = 'output window, operand 0']
    #allocation6 [shape = 's32[2]{0}', space=sflag, size = 0x8, scoped, tag = 'scoped memory for tpu_custom_call.1']
    %9 = vsyncpa [#allocation6], 0
    %s10 = scalar_lea.sflag [#allocation6], 1
    %11 = vsyncpa %s10, 0
    loop: start=0, step=1, limit=6
    $region2: #{tpu_custom_call.1} parent=1 // loop_pre_header
      _
    $region3: #{tpu_custom_call.1} parent=1 // loop_header
      %s13 = sphi 0, %s17
      %p14 = scmp.ge.s32.totalorder %s13, 6
      %s20 = sphi 0, %s32
      %s21 = sphi 0, %s28
      %s22 = sphi 0, %s20
      %s23 = sphi 0, %s21
      %s24 = sphi 0, %s22
      %s25 = sphi 0, %s23
      %s37 = sphi 0, %s39
      %s40 = sphi 0, %s37
      %s41 = sphi 0, %s40
      %s57 = sphi 0, %s41
      %s65 = sphi 0, %s67
      %s68 = sphi 0, %s65
      %s69 = sphi 0, %s68
      %s85 = sphi 0, %s69
      %s93 = sphi 0, %s95
      %s96 = sphi 0, %s93
      %s97 = sphi 0, %s96
      %s113 = sphi 0, %s97
      %s121 = sphi 0, %s123
      %s124 = sphi 0, %s121
      %s125 = sphi 0, %s124
      %s141 = sphi 0, %s125
      %s149 = sphi 0, %s151
      %s152 = sphi 0, %s149
      %s153 = sphi 0, %s152
      %s169 = sphi 0, %s153
    $region4: #{tpu_custom_call.1} parent=1 // loop_header_branch
      %16 = sbr.rel (%p14) target = $region8
    $region5: #{tpu_custom_call.1} parent=1 // loop_body
      %s18 = ssub.s32 %s13, 1
      %s19 = ssub.s32 %s13, 2
      %s26 = sadd.s32 1, %s21
      %p27 = scmp.ge.s32.totalorder %s26, 2
      %s28 = scalar_select %p27, 0, %s26
      %s29 = sadd.s32 1, %s20
      %s30 = scalar_select %p27, %s29, %s20
      %p31 = scmp.ge.s32.totalorder %s30, 2
      %s32 = scalar_select %p31, 0, %s30
      %s33 = ssub.s32 %s20, %s32
      %s34 = ssub.s32 %s21, %s28
      %s35 = sor.u32 %s33, %s34
      %p36 = scmp.eq.s32.totalorder %s35, 0
      %s38 = sadd.s32 %s37, 1
      %s39 = scalar_select %p36, %s37, %s38
      %p42 = pneg %p36
      %p43 = scmp.eq.s32.totalorder %s13, 3
      %p44 = por %p42, %p43
      %p45 = scmp.ne.s32.totalorder %s37, %s40
      %p46 = scmp.eq.s32.totalorder %s13, 0
      %p47 = por %p45, %p46
      %p48 = scmp.ne.s32.totalorder %s37, %s40
      %p49 = scmp.eq.s32.totalorder %s18, 3
      %p50 = por %p48, %p49
      %p51 = scmp.ne.s32.totalorder %s40, %s41
      %p52 = scmp.eq.s32.totalorder %s18, 0
      %p53 = por %p51, %p52
      %p54 = scmp.ne.s32.totalorder %s40, %s41
      %p55 = scmp.eq.s32.totalorder %s19, 3
      %p56 = por %p54, %p55
      %p58 = scmp.ne.s32.totalorder %s41, %s57
      %p59 = scmp.eq.s32.totalorder %s19, 0
      %p60 = por %p58, %p59
      %s61 = ssub.s32 %s20, %s32
      %s62 = ssub.s32 %s21, %s28
      %s63 = sor.u32 %s61, %s62
      %p64 = scmp.eq.s32.totalorder %s63, 0
      %s66 = sadd.s32 %s65, 1
      %s67 = scalar_select %p64, %s65, %s66
      %p70 = pneg %p64
      %p71 = scmp.eq.s32.totalorder %s13, 3
      %p72 = por %p70, %p71
      %p73 = scmp.ne.s32.totalorder %s65, %s68
      %p74 = scmp.eq.s32.totalorder %s13, 0
      %p75 = por %p73, %p74
      %p76 = scmp.ne.s32.totalorder %s65, %s68
      %p77 = scmp.eq.s32.totalorder %s18, 3
      %p78 = por %p76, %p77
      %p79 = scmp.ne.s32.totalorder %s68, %s69
      %p80 = scmp.eq.s32.totalorder %s18, 0
      %p81 = por %p79, %p80
      %p82 = scmp.ne.s32.totalorder %s68, %s69
      %p83 = scmp.eq.s32.totalorder %s19, 3
      %p84 = por %p82, %p83
      %p86 = scmp.ne.s32.totalorder %s69, %s85
      %p87 = scmp.eq.s32.totalorder %s19, 0
      %p88 = por %p86, %p87
      %s89 = ssub.s32 %s20, %s32
      %s90 = ssub.s32 %s21, %s28
      %s91 = sor.u32 %s89, %s90
      %p92 = scmp.eq.s32.totalorder %s91, 0
      %s94 = sadd.s32 %s93, 1
      %s95 = scalar_select %p92, %s93, %s94
      %p98 = pneg %p92
      %p99 = scmp.eq.s32.totalorder %s13, 3
      %p100 = por %p98, %p99
      %p101 = scmp.ne.s32.totalorder %s93, %s96
      %p102 = scmp.eq.s32.totalorder %s13, 0
      %p103 = por %p101, %p102
      %p104 = scmp.ne.s32.totalorder %s93, %s96
      %p105 = scmp.eq.s32.totalorder %s18, 3
      %p106 = por %p104, %p105
      %p107 = scmp.ne.s32.totalorder %s96, %s97
      %p108 = scmp.eq.s32.totalorder %s18, 0
      %p109 = por %p107, %p108
      %p110 = scmp.ne.s32.totalorder %s96, %s97
      %p111 = scmp.eq.s32.totalorder %s19, 3
      %p112 = por %p110, %p111
      %p114 = scmp.ne.s32.totalorder %s97, %s113
      %p115 = scmp.eq.s32.totalorder %s19, 0
      %p116 = por %p114, %p115
      %s117 = ssub.s32 %s20, %s32
      %s118 = ssub.s32 %s21, %s28
      %s119 = sor.u32 %s117, %s118
      %p120 = scmp.eq.s32.totalorder %s119, 0
      %s122 = sadd.s32 %s121, 1
      %s123 = scalar_select %p120, %s121, %s122
      %p126 = pneg %p120
      %p127 = scmp.eq.s32.totalorder %s13, 3
      %p128 = por %p126, %p127
      %p129 = scmp.ne.s32.totalorder %s121, %s124
      %p130 = scmp.eq.s32.totalorder %s13, 0
      %p131 = por %p129, %p130
      %p132 = scmp.ne.s32.totalorder %s121, %s124
      %p133 = scmp.eq.s32.totalorder %s18, 3
      %p134 = por %p132, %p133
      %p135 = scmp.ne.s32.totalorder %s124, %s125
      %p136 = scmp.eq.s32.totalorder %s18, 0
      %p137 = por %p135, %p136
      %p138 = scmp.ne.s32.totalorder %s124, %s125
      %p139 = scmp.eq.s32.totalorder %s19, 3
      %p140 = por %p138, %p139
      %p142 = scmp.ne.s32.totalorder %s125, %s141
      %p143 = scmp.eq.s32.totalorder %s19, 0
      %p144 = por %p142, %p143
      %s145 = ssub.s32 %s20, %s32
      %s146 = ssub.s32 %s21, %s28
      %s147 = sor.u32 %s145, %s146
      %p148 = scmp.eq.s32.totalorder %s147, 0
      %s150 = sadd.s32 %s149, 1
      %s151 = scalar_select %p148, %s149, %s150
      %p154 = pneg %p148
      %p155 = scmp.eq.s32.totalorder %s13, 3
      %p156 = por %p154, %p155
      %p157 = scmp.ne.s32.totalorder %s149, %s152
      %p158 = scmp.eq.s32.totalorder %s13, 0
      %p159 = por %p157, %p158
      %p160 = scmp.ne.s32.totalorder %s149, %s152
      %p161 = scmp.eq.s32.totalorder %s18, 3
      %p162 = por %p160, %p161
      %p163 = scmp.ne.s32.totalorder %s152, %s153
      %p164 = scmp.eq.s32.totalorder %s18, 0
      %p165 = por %p163, %p164
      %p166 = scmp.ne.s32.totalorder %s152, %s153
      %p167 = scmp.eq.s32.totalorder %s19, 3
      %p168 = por %p166, %p167
      %p170 = scmp.ne.s32.totalorder %s153, %s169
      %p171 = scmp.eq.s32.totalorder %s19, 0
      %p172 = por %p170, %p171
      %p173 = scmp.le.s32.totalorder 1, %s13
      %p174 = scmp.lt.s32.totalorder %s13, 5
      %p175 = pnand %p173, %p174
      %p176 = pneg %p175
      // Predicated region
      $region9: #{tpu_custom_call.1} parent=5 // pred_check
        _
      $region10: #{tpu_custom_call.1} parent=5 // pred_check_branch
        %178 = sbr.rel (%p175) target = $region12
      $region11: #{tpu_custom_call.1} parent=5 // pred_region
        %s179 = ssub.s32 %s13, 1
      $region12: #{tpu_custom_call.1} parent=5 // pred_fallthru
        _
      %p180 = scmp.lt.s32.totalorder %s13, 4
      // Predicated region
      $region13: #{tpu_custom_call.1} parent=5 // pred_check
        %p181 = pneg %p180
      $region14: #{tpu_custom_call.1} parent=5 // pred_check_branch
        %183 = sbr.rel (%p181) target = $region16
      $region15: #{tpu_custom_call.1} parent=5 // pred_region
        // Predicated region
        $region17: #{tpu_custom_call.1} parent=15 // pred_check
          %p184 = pneg %p47
        $region18: #{tpu_custom_call.1} parent=15 // pred_check_branch
          %186 = sbr.rel (%p184) target = $region20
        $region19: #{tpu_custom_call.1} parent=15 // pred_region
          %s187 = sand.u32 %s37, 1
          %s188 = sand.u32 %s37, 1
          %s189 = smul.addr %s188, 16
          %s190 = scalar_lea.vmem [#allocation2], %s189
          %s191 = smul.addr %s20, 4
          %s192 = sadd.s32 %s21, %s191
          %s193 = smul.addr %s192, 8
          %s194 = scalar_lea.vmem %s0, %s193
          // Predicated region
          $region21: #{tpu_custom_call.1} parent=19 // pred_check
            _
          $region22: #{tpu_custom_call.1} parent=19 // pred_check_branch
            %196 = sbr.rel (0) target = $region24
          $region23: #{tpu_custom_call.1} parent=19 // pred_region
            // Predicated region
            $region25: #{tpu_custom_call.1} parent=23 // pred_check
              _
            $region26: #{tpu_custom_call.1} parent=23 // pred_check_branch
              %198 = sbr.rel (0) target = $region28
            $region27: #{tpu_custom_call.1} parent=23 // pred_region
              // Predicated region
              $region40: #{tpu_custom_call.1} parent=27 // pred_check
                _
              $region41: #{tpu_custom_call.1} parent=27 // pred_check_branch
                %215 = sbr.rel (0) target = $region43
              $region42: #{tpu_custom_call.1} parent=27 // pred_region
                loop: start=0, step=1, limit=1
                $region44: #{tpu_custom_call.1} parent=42 // loop_pre_header
                  _
                $region45: #{tpu_custom_call.1} parent=42 // loop_header
                  %s217 = sphi 0, %s221
                  %p218 = scmp.ge.s32.totalorder %s217, 1
                  %s222 = sphi %s194, %s194
                  %s223 = sphi %s190, %s190
                $region46: #{tpu_custom_call.1} parent=42 // loop_header_branch
                  %220 = sbr.rel (%p218) target = $region50
                $region47: #{tpu_custom_call.1} parent=42 // loop_body
                  %v224 = vld [vmem:[%s222] sm:$0xff]
                  %225 = vst [vmem:[%s223] sm:$0xff] %v224
                  %v226 = vld [vmem:[%s222 + $0x10] sm:$0xff]
                  %227 = vst [vmem:[%s223 + $0x8] sm:$0xff] %v226
                $region48: #{tpu_custom_call.1} parent=42 // loop_footer
                  %s221 = sadd.s32 1, %s217
                $region49: #{tpu_custom_call.1} parent=42 // loop_footer_branch
                  %216 = sbr.rel target = $region45
                $region50: #{tpu_custom_call.1} parent=42 // loop_exit
                  _
              $region43: #{tpu_custom_call.1} parent=27 // pred_fallthru
                _
              // Predicated region
              $region51: #{tpu_custom_call.1} parent=27 // pred_check
                _
              $region52: #{tpu_custom_call.1} parent=27 // pred_check_branch
                %229 = sbr.rel target = $region54
              $region53: #{tpu_custom_call.1} parent=27 // pred_region
                _
              $region54: #{tpu_custom_call.1} parent=27 // pred_fallthru
                _
            $region28: #{tpu_custom_call.1} parent=23 // pred_fallthru
              _
            // Predicated region
            $region29: #{tpu_custom_call.1} parent=23 // pred_check
              _
            $region30: #{tpu_custom_call.1} parent=23 // pred_check_branch
              %200 = sbr.rel target = $region32
            $region31: #{tpu_custom_call.1} parent=23 // pred_region
              loop: start=0, step=1, limit=1
              $region33: #{tpu_custom_call.1} parent=31 // loop_pre_header
                _
              $region34: #{tpu_custom_call.1} parent=31 // loop_header
                %s203 = sphi 0, %s207
                %p204 = scmp.ge.s32.totalorder %s203, 1
                %s208 = sphi %s194, %s194
                %s209 = sphi %s190, %s190
              $region35: #{tpu_custom_call.1} parent=31 // loop_header_branch
                %206 = sbr.rel (%p204) target = $region39
              $region36: #{tpu_custom_call.1} parent=31 // loop_body
                %v210 = vld [vmem:[%s208] sm:$0xff]
                %211 = vst [vmem:[%s209] sm:$0xff] %v210
                %v212 = vld [vmem:[%s208 + $0x10] sm:$0xff]
                %213 = vst [vmem:[%s209 + $0x8] sm:$0xff] %v212
              $region37: #{tpu_custom_call.1} parent=31 // loop_footer
                %s207 = sadd.s32 1, %s203
              $region38: #{tpu_custom_call.1} parent=31 // loop_footer_branch
                %202 = sbr.rel target = $region34
              $region39: #{tpu_custom_call.1} parent=31 // loop_exit
                _
            $region32: #{tpu_custom_call.1} parent=23 // pred_fallthru
              _
          $region24: #{tpu_custom_call.1} parent=19 // pred_fallthru
            _
          %230 = vnop
        $region20: #{tpu_custom_call.1} parent=15 // pred_fallthru
          _
        // Predicated region
        $region55: #{tpu_custom_call.1} parent=15 // pred_check
          %p231 = pneg %p75
        $region56: #{tpu_custom_call.1} parent=15 // pred_check_branch
          %233 = sbr.rel (%p231) target = $region58
        $region57: #{tpu_custom_call.1} parent=15 // pred_region
          %p234 = scmp.lt.s32.totalorder %s20, 1
          %s235 = scalar_select %p234, %s20, 1
          %p236 = scmp.lt.s32.totalorder %s21, 1
          %s237 = scalar_select %p236, %s21, 1
          %s238 = smul.addr %s235, 2
          %s239 = sadd.s32 %s237, %s238
          %s240 = smul.addr %s239, 4
          %s241 = scalar_lea.vmem %s1, %s240
        $region58: #{tpu_custom_call.1} parent=15 // pred_fallthru
          _
        // Predicated region
        $region59: #{tpu_custom_call.1} parent=15 // pred_check
          %p242 = pneg %p103
        $region60: #{tpu_custom_call.1} parent=15 // pred_check_branch
          %244 = sbr.rel (%p242) target = $region62
        $region61: #{tpu_custom_call.1} parent=15 // pred_region
          %s245 = sand.u32 %s93, 1
          %s246 = sand.u32 %s93, 1
          %s247 = smul.addr %s246, 16
          %s248 = scalar_lea.vmem [#allocation3], %s247
          %s249 = smul.addr %s20, 4
          %s250 = sadd.s32 %s21, %s249
          %s251 = smul.addr %s250, 8
          %s252 = scalar_lea.vmem %s2, %s251
          // Predicated region
          $region63: #{tpu_custom_call.1} parent=61 // pred_check
            _
          $region64: #{tpu_custom_call.1} parent=61 // pred_check_branch
            %254 = sbr.rel (0) target = $region66
          $region65: #{tpu_custom_call.1} parent=61 // pred_region
            // Predicated region
            $region67: #{tpu_custom_call.1} parent=65 // pred_check
              _
            $region68: #{tpu_custom_call.1} parent=65 // pred_check_branch
              %256 = sbr.rel (0) target = $region70
            $region69: #{tpu_custom_call.1} parent=65 // pred_region
              // Predicated region
              $region82: #{tpu_custom_call.1} parent=69 // pred_check
                _
              $region83: #{tpu_custom_call.1} parent=69 // pred_check_branch
                %273 = sbr.rel (0) target = $region85
              $region84: #{tpu_custom_call.1} parent=69 // pred_region
                loop: start=0, step=1, limit=1
                $region86: #{tpu_custom_call.1} parent=84 // loop_pre_header
                  _
                $region87: #{tpu_custom_call.1} parent=84 // loop_header
                  %s275 = sphi 0, %s279
                  %p276 = scmp.ge.s32.totalorder %s275, 1
                  %s280 = sphi %s252, %s252
                  %s281 = sphi %s248, %s248
                $region88: #{tpu_custom_call.1} parent=84 // loop_header_branch
                  %278 = sbr.rel (%p276) target = $region92
                $region89: #{tpu_custom_call.1} parent=84 // loop_body
                  %v282 = vld [vmem:[%s280] sm:$0xff]
                  %283 = vst [vmem:[%s281] sm:$0xff] %v282
                  %v284 = vld [vmem:[%s280 + $0x10] sm:$0xff]
                  %285 = vst [vmem:[%s281 + $0x8] sm:$0xff] %v284
                $region90: #{tpu_custom_call.1} parent=84 // loop_footer
                  %s279 = sadd.s32 1, %s275
                $region91: #{tpu_custom_call.1} parent=84 // loop_footer_branch
                  %274 = sbr.rel target = $region87
                $region92: #{tpu_custom_call.1} parent=84 // loop_exit
                  _
              $region85: #{tpu_custom_call.1} parent=69 // pred_fallthru
                _
              // Predicated region
              $region93: #{tpu_custom_call.1} parent=69 // pred_check
                _
              $region94: #{tpu_custom_call.1} parent=69 // pred_check_branch
                %287 = sbr.rel target = $region96
              $region95: #{tpu_custom_call.1} parent=69 // pred_region
                _
              $region96: #{tpu_custom_call.1} parent=69 // pred_fallthru
                _
            $region70: #{tpu_custom_call.1} parent=65 // pred_fallthru
              _
            // Predicated region
            $region71: #{tpu_custom_call.1} parent=65 // pred_check
              _
            $region72: #{tpu_custom_call.1} parent=65 // pred_check_branch
              %258 = sbr.rel target = $region74
            $region73: #{tpu_custom_call.1} parent=65 // pred_region
              loop: start=0, step=1, limit=1
              $region75: #{tpu_custom_call.1} parent=73 // loop_pre_header
                _
              $region76: #{tpu_custom_call.1} parent=73 // loop_header
                %s261 = sphi 0, %s265
                %p262 = scmp.ge.s32.totalorder %s261, 1
                %s266 = sphi %s252, %s252
                %s267 = sphi %s248, %s248
              $region77: #{tpu_custom_call.1} parent=73 // loop_header_branch
                %264 = sbr.rel (%p262) target = $region81
              $region78: #{tpu_custom_call.1} parent=73 // loop_body
                %v268 = vld [vmem:[%s266] sm:$0xff]
                %269 = vst [vmem:[%s267] sm:$0xff] %v268
                %v270 = vld [vmem:[%s266 + $0x10] sm:$0xff]
                %271 = vst [vmem:[%s267 + $0x8] sm:$0xff] %v270
              $region79: #{tpu_custom_call.1} parent=73 // loop_footer
                %s265 = sadd.s32 1, %s261
              $region80: #{tpu_custom_call.1} parent=73 // loop_footer_branch
                %260 = sbr.rel target = $region76
              $region81: #{tpu_custom_call.1} parent=73 // loop_exit
                _
            $region74: #{tpu_custom_call.1} parent=65 // pred_fallthru
              _
          $region66: #{tpu_custom_call.1} parent=61 // pred_fallthru
            _
          %288 = vnop
        $region62: #{tpu_custom_call.1} parent=15 // pred_fallthru
          _
        // Predicated region
        $region97: #{tpu_custom_call.1} parent=15 // pred_check
          %p289 = pneg %p131
        $region98: #{tpu_custom_call.1} parent=15 // pred_check_branch
          %291 = sbr.rel (%p289) target = $region100
        $region99: #{tpu_custom_call.1} parent=15 // pred_region
          %s292 = sand.u32 %s121, 1
          %s293 = sand.u32 %s121, 1
          %s294 = smul.addr %s293, 16
          %s295 = scalar_lea.vmem [#allocation4], %s294
          %s296 = smul.addr %s20, 4
          %s297 = sadd.s32 %s21, %s296
          %s298 = smul.addr %s297, 8
          %s299 = scalar_lea.vmem %s3, %s298
          // Predicated region
          $region101: #{tpu_custom_call.1} parent=99 // pred_check
            _
          $region102: #{tpu_custom_call.1} parent=99 // pred_check_branch
            %301 = sbr.rel (0) target = $region104
          $region103: #{tpu_custom_call.1} parent=99 // pred_region
            // Predicated region
            $region105: #{tpu_custom_call.1} parent=103 // pred_check
              _
            $region106: #{tpu_custom_call.1} parent=103 // pred_check_branch
              %303 = sbr.rel (0) target = $region108
            $region107: #{tpu_custom_call.1} parent=103 // pred_region
              // Predicated region
              $region120: #{tpu_custom_call.1} parent=107 // pred_check
                _
              $region121: #{tpu_custom_call.1} parent=107 // pred_check_branch
                %320 = sbr.rel (0) target = $region123
              $region122: #{tpu_custom_call.1} parent=107 // pred_region
                loop: start=0, step=1, limit=1
                $region124: #{tpu_custom_call.1} parent=122 // loop_pre_header
                  _
                $region125: #{tpu_custom_call.1} parent=122 // loop_header
                  %s322 = sphi 0, %s326
                  %p323 = scmp.ge.s32.totalorder %s322, 1
                  %s327 = sphi %s299, %s299
                  %s328 = sphi %s295, %s295
                $region126: #{tpu_custom_call.1} parent=122 // loop_header_branch
                  %325 = sbr.rel (%p323) target = $region130
                $region127: #{tpu_custom_call.1} parent=122 // loop_body
                  %v329 = vld [vmem:[%s327] sm:$0xff]
                  %330 = vst [vmem:[%s328] sm:$0xff] %v329
                  %v331 = vld [vmem:[%s327 + $0x10] sm:$0xff]
                  %332 = vst [vmem:[%s328 + $0x8] sm:$0xff] %v331
                $region128: #{tpu_custom_call.1} parent=122 // loop_footer
                  %s326 = sadd.s32 1, %s322
                $region129: #{tpu_custom_call.1} parent=122 // loop_footer_branch
                  %321 = sbr.rel target = $region125
                $region130: #{tpu_custom_call.1} parent=122 // loop_exit
                  _
              $region123: #{tpu_custom_call.1} parent=107 // pred_fallthru
                _
              // Predicated region
              $region131: #{tpu_custom_call.1} parent=107 // pred_check
                _
              $region132: #{tpu_custom_call.1} parent=107 // pred_check_branch
                %334 = sbr.rel target = $region134
              $region133: #{tpu_custom_call.1} parent=107 // pred_region
                _
              $region134: #{tpu_custom_call.1} parent=107 // pred_fallthru
                _
            $region108: #{tpu_custom_call.1} parent=103 // pred_fallthru
              _
            // Predicated region
            $region109: #{tpu_custom_call.1} parent=103 // pred_check
              _
            $region110: #{tpu_custom_call.1} parent=103 // pred_check_branch
              %305 = sbr.rel target = $region112
            $region111: #{tpu_custom_call.1} parent=103 // pred_region
              loop: start=0, step=1, limit=1
              $region113: #{tpu_custom_call.1} parent=111 // loop_pre_header
                _
              $region114: #{tpu_custom_call.1} parent=111 // loop_header
                %s308 = sphi 0, %s312
                %p309 = scmp.ge.s32.totalorder %s308, 1
                %s313 = sphi %s299, %s299
                %s314 = sphi %s295, %s295
              $region115: #{tpu_custom_call.1} parent=111 // loop_header_branch
                %311 = sbr.rel (%p309) target = $region119
              $region116: #{tpu_custom_call.1} parent=111 // loop_body
                %v315 = vld [vmem:[%s313] sm:$0xff]
                %316 = vst [vmem:[%s314] sm:$0xff] %v315
                %v317 = vld [vmem:[%s313 + $0x10] sm:$0xff]
                %318 = vst [vmem:[%s314 + $0x8] sm:$0xff] %v317
              $region117: #{tpu_custom_call.1} parent=111 // loop_footer
                %s312 = sadd.s32 1, %s308
              $region118: #{tpu_custom_call.1} parent=111 // loop_footer_branch
                %307 = sbr.rel target = $region114
              $region119: #{tpu_custom_call.1} parent=111 // loop_exit
                _
            $region112: #{tpu_custom_call.1} parent=103 // pred_fallthru
              _
          $region104: #{tpu_custom_call.1} parent=99 // pred_fallthru
            _
          %335 = vnop
        $region100: #{tpu_custom_call.1} parent=15 // pred_fallthru
          _
      $region16: #{tpu_custom_call.1} parent=5 // pred_fallthru
        _
      %p336 = scmp.le.s32.totalorder 1, %s13
      %p337 = scmp.lt.s32.totalorder %s13, 5
      %p338 = pnand %p336, %p337
      %p339 = pneg %p338
      // Predicated region
      $region135: #{tpu_custom_call.1} parent=5 // pred_check
        _
      $region136: #{tpu_custom_call.1} parent=5 // pred_check_branch
        %341 = sbr.rel (%p338) target = $region138
      $region137: #{tpu_custom_call.1} parent=5 // pred_region
        %s342 = ssub.s32 %s13, 1
        %s343 = sand.u32 %s40, 1
        %s344 = sand.u32 %s40, 1
        %s345 = smul.addr %s344, 16
        %s346 = scalar_lea.vmem [#allocation2], %s345
        // Predicated region
        $region139: #{tpu_custom_call.1} parent=137 // pred_check
          %p347 = pneg %p53
        $region140: #{tpu_custom_call.1} parent=137 // pred_check_branch
          %349 = sbr.rel (%p347) target = $region142
        $region141: #{tpu_custom_call.1} parent=137 // pred_region
          _
        $region142: #{tpu_custom_call.1} parent=137 // pred_fallthru
          _
        %s350 = sand.u32 %s96, 1
        %s351 = sand.u32 %s96, 1
        %s352 = smul.addr %s351, 16
        %s353 = scalar_lea.vmem [#allocation3], %s352
        // Predicated region
        $region143: #{tpu_custom_call.1} parent=137 // pred_check
          %p354 = pneg %p109
        $region144: #{tpu_custom_call.1} parent=137 // pred_check_branch
          %356 = sbr.rel (%p354) target = $region146
        $region145: #{tpu_custom_call.1} parent=137 // pred_region
          _
        $region146: #{tpu_custom_call.1} parent=137 // pred_fallthru
          _
        %s357 = sand.u32 %s124, 1
        %s358 = sand.u32 %s124, 1
        %s359 = smul.addr %s358, 16
        %s360 = scalar_lea.vmem [#allocation4], %s359
        // Predicated region
        $region147: #{tpu_custom_call.1} parent=137 // pred_check
          %p361 = pneg %p137
        $region148: #{tpu_custom_call.1} parent=137 // pred_check_branch
          %363 = sbr.rel (%p361) target = $region150
        $region149: #{tpu_custom_call.1} parent=137 // pred_region
          _
        $region150: #{tpu_custom_call.1} parent=137 // pred_fallthru
          _
        %s364 = sand.u32 %s40, 1
        %s365 = sand.u32 %s40, 1
        %s366 = smul.addr %s365, 16
        %s367 = scalar_lea.vmem [#allocation2], %s366
        %p368 = pneg %p53
        %p369 = pneg %p50
        %p370 = scmp.lt.s32.totalorder %s22, 1
        %s371 = scalar_select %p370, %s22, 1
        %p372 = scmp.lt.s32.totalorder %s23, 1
        %s373 = scalar_select %p372, %s23, 1
        %s374 = smul.addr %s371, 2
        %s375 = sadd.s32 %s373, %s374
        %s376 = smul.addr %s375, 4
        %s377 = scalar_lea.vmem %s1, %s376
        %p378 = pneg %p81
        %p379 = pneg %p78
        %s380 = sand.u32 %s96, 1
        %s381 = sand.u32 %s96, 1
        %s382 = smul.addr %s381, 16
        %s383 = scalar_lea.vmem [#allocation3], %s382
        %p384 = pneg %p109
        %p385 = pneg %p106
        %s386 = sand.u32 %s124, 1
        %s387 = sand.u32 %s124, 1
        %s388 = smul.addr %s387, 16
        %s389 = scalar_lea.vmem [#allocation4], %s388
        %p390 = pneg %p137
        %p391 = pneg %p134
        %p392 = pneg %p165
        %p393 = pneg %p162
        %s394 = sand.u32 %s152, 1
        %s395 = scalar_lea.sflag [#allocation6], %s394
        %s396 = sand.u32 %s152, 1
        %s397 = scalar_lea.vmem [#allocation5], %s396
        %p398 = scmp.lt.s32.totalorder %s22, 1
        %s399 = scalar_select %p398, %s22, 1
        %p400 = scmp.lt.s32.totalorder %s23, 1
        %s401 = scalar_select %p400, %s23, 1
        %s402 = smul.addr %s399, 2
        %s403 = sadd.s32 %s401, %s402
        %s404 = smul.addr %s403, 4
        %s405 = scalar_lea.vmem %s1, %s404
        %v406 = vlaneseq
        %v407 = vshrl.u32 %v406, 7
        %v408 = vld [vmem:[%s346] sm:$0xf]
        %v409 = vld [vmem:[%s405] sm:$0x1]
        %vm410 = vcmp.ge.s32.totalorder %v409, 0
        %v411 = vlaneseq
        %v412 = vshrl.u32 %v411, 7
        %v413 = vsub.s32 0, %v412
        %v414 = vrot.slane %v409, %v413
        %vm415 = vcmp.eq.s32.totalorder %v414, %v407
        %v416 = vsel %vm410, 1, 0
        %v417 = vlaneseq
        %v418 = vshrl.u32 %v417, 7
        %v419 = vsub.s32 0, %v418
        %v420 = vrot.slane %v416, %v419
        %vm421 = vcmp.eq.s32.totalorder %v420, 1
        %vm422 = vmand %vm421, %vm415
        %v423 = vsel %vm422, 1, 0
        %v424 = vcvt.s32.f32 %v423
        %vm425 = vcmp.ne.s32.totalorder %v409, 4294967294
        %v426 = vsel %vm425, 1, 0
        %v427 = vcvt.s32.f32 %v426
        %v428 = vmax.f32 %v408, 0.0
        %v429 = vand.u32 2147483647, %v408
        %v430 = vsub.f32 0.0, %v429
        %v431 = vmul.f32 %v430, 1.442695
        %v432 = vpow.pop %v431
        %v433 = vadd.f32 %v432, 1.0
        %v434 = vlog2.pop %v433
        %v435 = vmul.f32 %v434, 0.6931472
        %v436 = vmul.f32 -0.5, %v432
        %v437 = vadd.f32 %v436, 1.0
        %v438 = vmul.f32 %v437, %v432
        %v439 = vand.u32 2147483647, %v432
        %vm440 = vcmp.lt.f32.partialorder %v439, 0.0004427343
        %v441 = vsel %vm440, %v438, %v435
        %v442 = vmul.f32 %v408, %v424
        %v443 = vsub.f32 %v428, %v442
        %v444 = vadd.f32 %v443, %v441
        %v445 = vadd.f32 %v432, 1.0
        %v446 = vrcp.pop %v445
        %v447 = vmul.f32 %v445, %v446
        %v448 = vsub.f32 2.0, %v447
        %v449 = vmul.f32 %v446, %v448
        %vm450 = vcmp.ge.f32.partialorder %v408, 0.0
        %v451 = vsub.f32 1.0, %v449
        %v452 = vsel %vm450, %v449, %v451
        %vm453 = vcmp.gt.f32.partialorder %v424, 0.0
        %v454 = vsub.f32 1.0, %v452
        %v455 = vsel %vm453, %v454, %v452
        %v456 = vmul.f32 %v455, %v455
        %v457 = vmul.f32 %v424, -0.5
        %v458 = vadd.f32 %v457, 0.75
        %v459 = vlaneseq
        %v460 = vshrl.u32 %v459, 7
        %v461 = vsub.s32 0, %v460
        %v462 = vrot.slane %v427, %v461
        %v463 = vmul.f32 %v458, %v462
        %v464 = vmul.f32 %v463, %v456
        %v465 = vmul.f32 %v464, %v444
        %vm466 = vcmask 1043456
        %v467 = vsel %vm466, %v465, 0.0
        %468 = vadd.xlane.f32.xlu0 %v467
        %v469 = vpop.xlane.xlu0 %468
        %v470 = vrot.slane %v469, 4
        %v471 = vadd.f32 %v469, %v470
        %v472 = vrot.slane %v471, 2
        %v473 = vadd.f32 %v471, %v472
        %v474 = vrot.slane %v473, 1
        %v475 = vadd.f32 %v473, %v474
        %s476 = vtos %v475
        %s477 = sadd.f32 %s476, 0.0
        %v478 = vld [vmem:[%s346 + $0x4] sm:$0xf]
        %v479 = vld [vmem:[%s405 + $0x1] sm:$0x1]
        %vm480 = vcmp.ge.s32.totalorder %v479, 0
        %v481 = vlaneseq
        %v482 = vshrl.u32 %v481, 7
        %v483 = vsub.s32 0, %v482
        %v484 = vrot.slane %v479, %v483
        %vm485 = vcmp.eq.s32.totalorder %v484, %v407
        %v486 = vsel %vm480, 1, 0
        %v487 = vlaneseq
        %v488 = vshrl.u32 %v487, 7
        %v489 = vsub.s32 0, %v488
        %v490 = vrot.slane %v486, %v489
        %vm491 = vcmp.eq.s32.totalorder %v490, 1
        %vm492 = vmand %vm491, %vm485
        %v493 = vsel %vm492, 1, 0
        %v494 = vcvt.s32.f32 %v493
        %vm495 = vcmp.ne.s32.totalorder %v479, 4294967294
        %v496 = vsel %vm495, 1, 0
        %v497 = vcvt.s32.f32 %v496
        %v498 = vmax.f32 %v478, 0.0
        %v499 = vand.u32 2147483647, %v478
        %v500 = vsub.f32 0.0, %v499
        %v501 = vmul.f32 %v500, 1.442695
        %v502 = vpow.pop %v501
        %v503 = vadd.f32 %v502, 1.0
        %v504 = vlog2.pop %v503
        %v505 = vmul.f32 %v504, 0.6931472
        %v506 = vmul.f32 -0.5, %v502
        %v507 = vadd.f32 %v506, 1.0
        %v508 = vmul.f32 %v507, %v502
        %v509 = vand.u32 2147483647, %v502
        %vm510 = vcmp.lt.f32.partialorder %v509, 0.0004427343
        %v511 = vsel %vm510, %v508, %v505
        %v512 = vmul.f32 %v478, %v494
        %v513 = vsub.f32 %v498, %v512
        %v514 = vadd.f32 %v513, %v511
        %v515 = vadd.f32 %v502, 1.0
        %v516 = vrcp.pop %v515
        %v517 = vmul.f32 %v515, %v516
        %v518 = vsub.f32 2.0, %v517
        %v519 = vmul.f32 %v516, %v518
        %vm520 = vcmp.ge.f32.partialorder %v478, 0.0
        %v521 = vsub.f32 1.0, %v519
        %v522 = vsel %vm520, %v519, %v521
        %vm523 = vcmp.gt.f32.partialorder %v494, 0.0
        %v524 = vsub.f32 1.0, %v522
        %v525 = vsel %vm523, %v524, %v522
        %v526 = vmul.f32 %v525, %v525
        %v527 = vmul.f32 %v494, -0.5
        %v528 = vadd.f32 %v527, 0.75
        %v529 = vlaneseq
        %v530 = vshrl.u32 %v529, 7
        %v531 = vsub.s32 0, %v530
        %v532 = vrot.slane %v497, %v531
        %v533 = vmul.f32 %v528, %v532
        %v534 = vmul.f32 %v533, %v526
        %v535 = vmul.f32 %v534, %v514
        %v536 = vsel %vm466, %v535, 0.0
        %537 = vadd.xlane.f32.xlu0 %v536
        %v538 = vpop.xlane.xlu0 %537
        %v539 = vrot.slane %v538, 4
        %v540 = vadd.f32 %v538, %v539
        %v541 = vrot.slane %v540, 2
        %v542 = vadd.f32 %v540, %v541
        %v543 = vrot.slane %v542, 1
        %v544 = vadd.f32 %v542, %v543
        %s545 = vtos %v544
        %s546 = sadd.f32 %s477, %s545
        %v547 = vld [vmem:[%s346 + $0x8] sm:$0xf]
        %v548 = vld [vmem:[%s405 + $0x2] sm:$0x1]
        %vm549 = vcmp.ge.s32.totalorder %v548, 0
        %v550 = vlaneseq
        %v551 = vshrl.u32 %v550, 7
        %v552 = vsub.s32 0, %v551
        %v553 = vrot.slane %v548, %v552
        %vm554 = vcmp.eq.s32.totalorder %v553, %v407
        %v555 = vsel %vm549, 1, 0
        %v556 = vlaneseq
        %v557 = vshrl.u32 %v556, 7
        %v558 = vsub.s32 0, %v557
        %v559 = vrot.slane %v555, %v558
        %vm560 = vcmp.eq.s32.totalorder %v559, 1
        %vm561 = vmand %vm560, %vm554
        %v562 = vsel %vm561, 1, 0
        %v563 = vcvt.s32.f32 %v562
        %vm564 = vcmp.ne.s32.totalorder %v548, 4294967294
        %v565 = vsel %vm564, 1, 0
        %v566 = vcvt.s32.f32 %v565
        %v567 = vmax.f32 %v547, 0.0
        %v568 = vand.u32 2147483647, %v547
        %v569 = vsub.f32 0.0, %v568
        %v570 = vmul.f32 %v569, 1.442695
        %v571 = vpow.pop %v570
        %v572 = vadd.f32 %v571, 1.0
        %v573 = vlog2.pop %v572
        %v574 = vmul.f32 %v573, 0.6931472
        %v575 = vmul.f32 -0.5, %v571
        %v576 = vadd.f32 %v575, 1.0
        %v577 = vmul.f32 %v576, %v571
        %v578 = vand.u32 2147483647, %v571
        %vm579 = vcmp.lt.f32.partialorder %v578, 0.0004427343
        %v580 = vsel %vm579, %v577, %v574
        %v581 = vmul.f32 %v547, %v563
        %v582 = vsub.f32 %v567, %v581
        %v583 = vadd.f32 %v582, %v580
        %v584 = vadd.f32 %v571, 1.0
        %v585 = vrcp.pop %v584
        %v586 = vmul.f32 %v584, %v585
        %v587 = vsub.f32 2.0, %v586
        %v588 = vmul.f32 %v585, %v587
        %vm589 = vcmp.ge.f32.partialorder %v547, 0.0
        %v590 = vsub.f32 1.0, %v588
        %v591 = vsel %vm589, %v588, %v590
        %vm592 = vcmp.gt.f32.partialorder %v563, 0.0
        %v593 = vsub.f32 1.0, %v591
        %v594 = vsel %vm592, %v593, %v591
        %v595 = vmul.f32 %v594, %v594
        %v596 = vmul.f32 %v563, -0.5
        %v597 = vadd.f32 %v596, 0.75
        %v598 = vlaneseq
        %v599 = vshrl.u32 %v598, 7
        %v600 = vsub.s32 0, %v599
        %v601 = vrot.slane %v566, %v600
        %v602 = vmul.f32 %v597, %v601
        %v603 = vmul.f32 %v602, %v595
        %v604 = vmul.f32 %v603, %v583
        %v605 = vsel %vm466, %v604, 0.0
        %606 = vadd.xlane.f32.xlu0 %v605
        %v607 = vpop.xlane.xlu0 %606
        %v608 = vrot.slane %v607, 4
        %v609 = vadd.f32 %v607, %v608
        %v610 = vrot.slane %v609, 2
        %v611 = vadd.f32 %v609, %v610
        %v612 = vrot.slane %v611, 1
        %v613 = vadd.f32 %v611, %v612
        %s614 = vtos %v613
        %s615 = sadd.f32 %s546, %s614
        %v616 = vld [vmem:[%s353] sm:$0xff]
        %v617 = vld [vmem:[%s353 + $0x8] sm:$0xf]
        %v618 = vld [vmem:[%s360] sm:$0xff]
        %v619 = vld [vmem:[%s360 + $0x8] sm:$0xf]
        %v620 = vsub.f32 %v618, %v616
        %v621 = vsub.f32 %v619, %v617
        %v622 = vand.u32 2147483647, %v620
        %v623 = vand.u32 2147483647, %v621
        %v624 = vmin.f32 %v622, 0.1
        %v625 = vmin.f32 %v623, 0.1
        %v626 = vsub.f32 %v622, %v624
        %v627 = vsub.f32 %v623, %v625
        %v628 = vmul.f32 %v624, 0.5
        %v629 = vmul.f32 %v625, 0.5
        %v630 = vmul.f32 %v628, %v624
        %v631 = vmul.f32 %v629, %v625
        %v632 = vmul.f32 %v626, 0.1
        %v633 = vmul.f32 %v627, 0.1
        %v634 = vadd.f32 %v630, %v632
        %v635 = vadd.f32 %v631, %v633
        %vm636 = vcmp.ne.f32.partialorder %v618, 0.0
        %vm637 = vcmp.ne.f32.partialorder %v619, 0.0
        %v638 = vsel %vm636, 1, 0
        %v639 = vsel %vm637, 1, 0
        %v640 = vcvt.s32.f32 %v638
        %v641 = vcvt.s32.f32 %v639
        %v642 = vmul.f32 %v634, %v640
        %v643 = vmul.f32 %v635, %v641
        %v644 = vsel %vm466, %v643, 0.0
        %v645 = vadd.f32 %v642, %v644
        %646 = vadd.xlane.f32.xlu0 %v645
        %v647 = vpop.xlane.xlu0 %646
        %v648 = vrot.slane %v647, 4
        %v649 = vadd.f32 %v647, %v648
        %v650 = vrot.slane %v649, 2
        %v651 = vadd.f32 %v649, %v650
        %v652 = vrot.slane %v651, 1
        %v653 = vadd.f32 %v651, %v652
        %s654 = vtos %v653
        %v655 = vlaneseq
        %v656 = vand.u32 %v655, 127
        %vm657 = vcmp.eq.s32.totalorder %v656, 0
        %vm658 = vcmp.eq.s32.totalorder %v656, 1
        %v659 = vstv %s654
        %v660 = vsel %vm658, %v659, 0.0
        %v661 = vstv %s615
        %v662 = vsel %vm657, %v661, %v660
        %663 = vst [vmem:[%s397] sm:$0x1] %v662
        %s664 = sand.u32 %s152, 1
        %s665 = scalar_lea.sflag [#allocation6], %s664
        %s666 = sand.u32 %s152, 1
        %s667 = scalar_lea.vmem [#allocation5], %s666
        // Predicated region
        $region151: #{tpu_custom_call.1} parent=137 // pred_check
          %p668 = pneg %p162
        $region152: #{tpu_custom_call.1} parent=137 // pred_check_branch
          %670 = sbr.rel (%p668) target = $region154
        $region153: #{tpu_custom_call.1} parent=137 // pred_region
          %s672 = ssub.s32 16, 16
          %673 = vsyncadd %s665, %s672
          %s674 = smul.addr %s22, 2
          %s675 = sadd.s32 %s23, %s674
          %s676 = smul.addr %s675, 16
          %s677 = scalar_lea.hbm %s4, %s676
          %s679 = sshll.u32 %s667, 4
          %s680 = int_to_ptr.vmem [resolvable:$true] %s679
          %682 = dma.vmem_to_hbm [thread:$0]  %s680, 16, %s677, %s665
        $region154: #{tpu_custom_call.1} parent=137 // pred_fallthru
          _
      $region138: #{tpu_custom_call.1} parent=5 // pred_fallthru
        _
      %p683 = scmp.le.s32.totalorder 2, %s13
      // Predicated region
      $region155: #{tpu_custom_call.1} parent=5 // pred_check
        %p684 = pneg %p683
      $region156: #{tpu_custom_call.1} parent=5 // pred_check_branch
        %686 = sbr.rel (%p684) target = $region158
      $region157: #{tpu_custom_call.1} parent=5 // pred_region
        %s687 = ssub.s32 %s13, 2
        // Predicated region
        $region159: #{tpu_custom_call.1} parent=157 // pred_check
          %p688 = pneg %p168
        $region160: #{tpu_custom_call.1} parent=157 // pred_check_branch
          %690 = sbr.rel (%p688) target = $region162
        $region161: #{tpu_custom_call.1} parent=157 // pred_region
          %s691 = sand.u32 %s153, 1
          %s692 = scalar_lea.sflag [#allocation6], %s691
          %s693 = sand.u32 %s153, 1
          %s694 = scalar_lea.vmem [#allocation5], %s693
          %695 = dma.done %s692, 16
        $region162: #{tpu_custom_call.1} parent=157 // pred_fallthru
          _
      $region158: #{tpu_custom_call.1} parent=5 // pred_fallthru
        _
    $region6: #{tpu_custom_call.1} parent=1 // loop_footer
      %s17 = sadd.s32 1, %s13
    $region7: #{tpu_custom_call.1} parent=1 // loop_footer_branch
      %12 = sbr.rel target = $region3
    $region8: #{tpu_custom_call.1} parent=1 // loop_exit
      _
    %696 = vsyncpa [#allocation6], 1
    %s697 = scalar_lea.sflag [#allocation6], 1
    %698 = vsyncpa %s697, 1

</llo_original>
